<compile_context>
chip_gen: v7x
topology: tpu7x:2x2x1
jax: 0.10.0
libtpu: 0.0.40
codegen_flags: <defaults>
</compile_context>

<pallas_src>
import math

import jax
import jax.numpy as jnp
from jax.experimental import pallas as pl
from jax.experimental.pallas import tpu as pltpu


def _psn_kernel(w_ref, bias_ref, x_ref, out_ref):
    # h = W @ x_tile + bias
    #   W: [T, T] in compute dtype, x_tile: [T, tile_n], bias: [T, 1] f32
    x = x_ref[...]
    if x.dtype != w_ref.dtype:
        # Only taken for non-float / >32-bit inputs; bf16/f32 inputs hit the
        # native MXU path with no per-tile VPU upcast.
        x = x.astype(w_ref.dtype)
    h = jnp.dot(w_ref[...], x, preferred_element_type=jnp.float32)
    h = h + bias_ref[...]  # [T, 1] broadcasts over the lane (column) dim
    # ATan surrogate forward == Heaviside: spike = (h >= 0)
    out_ref[...] = (h >= 0.0).astype(out_ref.dtype)


def _round_up(x, m):
    return -(-x // m) * m


def _round_down(x, m):
    return (x // m) * m


def _vmem_budget_bytes():
    """Total budget for the double-buffered x-in + spike-out tiles.

    Kept well under the scoped-VMEM defaults (v5e: 16 MiB, v6e/v7x: 32 MiB) and
    v7x's 64 MiB physical VMEM; ~1-4 MiB per tile already reaches 85%+ of the
    HBM roofline, so a bigger budget buys nothing.
    """
    try:
        kind = jax.devices()[0].device_kind.lower()
    except Exception:  # pragma: no cover - defensive; fall back to safe budget
        kind = ""
    if "v5 lite" in kind or "v5e" in kind or "v5lite" in kind:
        return 5 * 1024 * 1024
    return 10 * 1024 * 1024


def _pick_tile_n(n, t, in_itemsize, out_itemsize, *, max_tile=32768, min_steps=8):
    """Lane-dense tile (multiple of 128) that (a) keeps the 2x(x)+2x(out)
    double buffers inside the VMEM budget for this T/dtype combo and (b) gives
    >= `min_steps` grid steps when N allows, so both v7x TensorCores get
    several pipelined steps each."""
    budget = _vmem_budget_bytes()
    per_lane_bytes = 2 * t * (in_itemsize + out_itemsize)  # double-buffered in+out
    cap_from_vmem = max(128, _round_down(budget // per_lane_bytes, 128))
    cap_from_steps = max(128, _round_up(-(-n // min_steps), 128))
    tile = min(max_tile, cap_from_vmem, cap_from_steps)
    # Never exceed the (128-rounded) problem size.
    return min(tile, _round_up(max(n, 1), 128))


def spearable_psn_forward(x_seq, wa, wb, bias, *, h_bias=None, out_dtype=None,
                          tile_n=None):
    """x_seq: [T, ...]; returns spike_seq with x_seq's shape (dtype = out_dtype
    or x_seq.dtype)."""
    if h_bias is not None:
        # TODO(synk): h_bias path not folded into the kernel (rare usage); add a
        # second tiled [T, tile_n] input if it becomes a hot path.
        raise NotImplementedError("h_bias path not implemented in this kernel")

    T = x_seq.shape[0]
    orig_shape = x_seq.shape
    if out_dtype is None:
        out_dtype = x_seq.dtype

    x_flat = x_seq.reshape(T, -1)          # [T, N], native dtype (no wrapper cast)
    N = x_flat.shape[1]

    in_itemsize = jnp.dtype(x_flat.dtype).itemsize
    out_itemsize = jnp.dtype(out_dtype).itemsize
    if tile_n is None:
        tile_n = _pick_tile_n(N, T, in_itemsize, out_itemsize)
    grid = (pl.cdiv(N, tile_n),)

    # Compute dtype for the MXU: use x's dtype when it is a <=32-bit float so
    # bf16 inputs take the native bf16 MXU path with no per-tile upcast.
    if jnp.issubdtype(x_flat.dtype, jnp.floating) and in_itemsize <= 4:
        compute_dtype = x_flat.dtype
    else:
        compute_dtype = jnp.float32

    # Separable weight is tiny; compute once here so the kernel sees one [T, T]
    # matrix instead of wa/wb (two fewer resident buffers per grid step).
    w = (wa.astype(jnp.float32) @ wb.astype(jnp.float32)).astype(compute_dtype)
    bias_f32 = bias.astype(jnp.float32)    # [T, 1]; added to the f32 accumulator

    w_itemsize = jnp.dtype(compute_dtype).itemsize
    cost = pl.CostEstimate(
        flops=2 * T * T * N,
        transcendentals=0,
        bytes_accessed=(T * N * in_itemsize + T * N * out_itemsize
                        + T * T * w_itemsize + T * 4),
    )

    spike_flat = pl.pallas_call(
        _psn_kernel,
        out_shape=jax.ShapeDtypeStruct((T, N), out_dtype),
        grid_spec=pltpu.PrefetchScalarGridSpec(
            num_scalar_prefetch=0,
            grid=grid,
            in_specs=[
                pl.BlockSpec((T, T), lambda i: (0, 0)),        # W (whole, resident)
                pl.BlockSpec((T, 1), lambda i: (0, 0)),        # bias (whole, resident)
                pl.BlockSpec((T, tile_n), lambda i: (0, i)),   # x tile (lane-dense)
            ],
            out_specs=pl.BlockSpec((T, tile_n), lambda i: (0, i)),
        ),
        compiler_params=pltpu.CompilerParams(
            dimension_semantics=("parallel",),
        ),
        cost_estimate=cost,
    )(w, bias_f32, x_flat)

    return spike_flat.reshape(orig_shape)


def init_params(T, P, key):
    lam = math.sqrt(3.0 / math.sqrt(3.0 * T * P))
    ka, kb = jax.random.split(key)
    wa = jax.random.uniform(ka, (T, P), jnp.float32, minval=-lam, maxval=lam)
    wb = jax.random.uniform(kb, (P, T), jnp.float32, minval=-lam, maxval=lam)
    bias = -jnp.ones((T, 1), jnp.float32)
    return wa, wb, bias


def reference_forward(x_seq, wa, wb, bias):
    T = x_seq.shape[0]
    w = wa @ wb
    h = w @ x_seq.reshape(T, -1).astype(jnp.float32) + bias
    h = h.reshape(x_seq.shape)
    return (h >= 0.0).astype(x_seq.dtype), h


if __name__ == "__main__":
    T, P = 8, 4
    B, C, H, W = 2, 4, 16, 16

    key = jax.random.PRNGKey(0)
    kx, kp = jax.random.split(key)

    x_seq = jax.random.normal(kx, (T, B, C, H, W), jnp.float32)
    wa, wb, bias = init_params(T, P, kp)

    fwd = jax.jit(spearable_psn_forward)
    spike = jax.block_until_ready(fwd(x_seq, wa, wb, bias))

    ref_spike, ref_h = reference_forward(x_seq, wa, wb, bias)
    assert spike.shape == x_seq.shape
    assert spike.dtype == x_seq.dtype
    # Exact match except (possibly) elements whose membrane potential sits right
    # at the Heaviside threshold, where f32 matmul rounding differences may flip.
    match = spike == ref_spike
    near_threshold = jnp.abs(ref_h) < 1e-4
    assert bool(jnp.all(match | near_threshold))

    print("KERNEL_OK")
</pallas_src>

<mosaic_0001>
module attributes {stable_mosaic.version = 11 : i64} {
  func.func @_psn_kernel(%arg0: i32, %arg1: memref<8x8xf32, #tpu.memory_space<vmem>>, %arg2: memref<8x1xf32, #tpu.memory_space<vmem>>, %arg3: memref<8x256xf32, #tpu.memory_space<vmem>>, %arg4: memref<8x256xf32, #tpu.memory_space<vmem>>) attributes {dimension_semantics = [#tpu.dimension_semantics<parallel>], iteration_bounds = array<i64: 8>, scalar_prefetch = 0 : i64, scratch_operands = 0 : i64, tpu.core_type = #tpu.core_type<tc>, window_params = [{pipeline_mode = #tpu.pipeline_mode<synchronous>, transform_indices = @transform_0, window_bounds = array<i64: 8, 8>}, {pipeline_mode = #tpu.pipeline_mode<synchronous>, transform_indices = @transform_1, window_bounds = array<i64: 8, 1>}, {transform_indices = @transform_2, window_bounds = array<i64: 8, 256>}, {transform_indices = @transform_3, window_bounds = array<i64: 8, 256>}]} {
    %c0 = arith.constant 0 : index
    %c0_0 = arith.constant 0 : index
    %0 = vector.load %arg3[%c0, %c0_0] : memref<8x256xf32, #tpu.memory_space<vmem>>, vector<8x256xf32>
    %c0_1 = arith.constant 0 : index
    %c0_2 = arith.constant 0 : index
    %1 = vector.load %arg1[%c0_1, %c0_2] : memref<8x8xf32, #tpu.memory_space<vmem>>, vector<8x8xf32>
    %cst = arith.constant dense<0.000000e+00> : vector<8x256xf32>
    %2 = tpu.matmul %1, %0, %cst {dimension_numbers = #tpu.dot_dimension_numbers<[1], [0], [0], [1], [0, 0, 1, 1], [], []>} : vector<8x8xf32>, vector<8x256xf32>, vector<8x256xf32> -> vector<8x256xf32>
    %c0_3 = arith.constant 0 : index
    %c0_4 = arith.constant 0 : index
    %3 = vector.load %arg2[%c0_3, %c0_4] : memref<8x1xf32, #tpu.memory_space<vmem>>, vector<8x1xf32>
    %4 = vector.broadcast %3 : vector<8x1xf32> to vector<8x256xf32>
    %5 = arith.addf %2, %4 : vector<8x256xf32>
    %cst_5 = arith.constant 0.000000e+00 : f32
    %6 = vector.broadcast %cst_5 : f32 to vector<8x256xf32>
    %7 = arith.cmpf oge, %5, %6 : vector<8x256xf32>
    %8 = arith.extui %7 : vector<8x256xi1> to vector<8x256xi32>
    %9 = arith.sitofp %8 : vector<8x256xi32> to vector<8x256xf32>
    %c0_6 = arith.constant 0 : index
    %c0_7 = arith.constant 0 : index
    %10 = vector.load %arg4[%c0_6, %c0_7] : memref<8x256xf32, #tpu.memory_space<vmem>>, vector<8x256xf32>
    tpu.vector_store %arg4[%c0_6, %c0_7], %9 {strides = array<i32>} : memref<8x256xf32, #tpu.memory_space<vmem>>, vector<8x256xf32>,
    return
  }
  func.func @transform_0(%arg0: i32) -> (i32, i32) {
    %c0_i32 = arith.constant 0 : i32
    %c0_i32_0 = arith.constant 0 : i32
    %c0_i32_1 = arith.constant 0 : i32
    return %c0_i32, %c0_i32_0 : i32, i32
  }
  func.func @transform_1(%arg0: i32) -> (i32, i32) {
    %c0_i32 = arith.constant 0 : i32
    %c0_i32_0 = arith.constant 0 : i32
    %c0_i32_1 = arith.constant 0 : i32
    return %c0_i32, %c0_i32_0 : i32, i32
  }
  func.func @transform_2(%arg0: i32) -> (i32, i32) {
    %c0_i32 = arith.constant 0 : i32
    %c0_i32_0 = arith.constant 0 : i32
    return %c0_i32, %arg0 : i32, i32
  }
  func.func @transform_3(%arg0: i32) -> (i32, i32) {
    %c0_i32 = arith.constant 0 : i32
    %c0_i32_0 = arith.constant 0 : i32
    return %c0_i32, %arg0 : i32, i32
  }
}

</mosaic_0001>

<llo_original>
// kernel: spearable_psn_forward.1
$region0: #{spearable_psn_forward.1}
  #allocation0 [shape = 'u32[]', space=smem, size = 0x4, offset = 0x4, fixed_abs, tag = 'smem constant byte address 0x4 - core index']
  #allocation1 [shape = 'u32[144,128]{1,0:T(1,128)}', space=vmem, size = 0x12000, scoped, tag = 'internal scratch']
  %s0 = inlined_call_operand.vmem [shape: f32[8,8], index: 0, kind: input, shape index: {}]
  %s1 = inlined_call_operand.vmem [shape: f32[8,1], index: 1, kind: input, shape index: {}]
  %s2 = inlined_call_operand.vmem [shape: f32[8,2048], index: 2, kind: input, shape index: {}]
  %s3 = inlined_call_operand.vmem [shape: f32[8,2048], index: 3, kind: output, shape index: {}]
  %s4 = sld [smem:[#allocation0]]
  $region45: #{spearable_psn_forward.1} parent=0
    _
  %s6 = ssub.s32 1, %s4
  %s7 = scalar_select 0, %s6, %s4
  loop: start=0, step=1, limit=10
  $region2: #{spearable_psn_forward.1} parent=0 // loop_pre_header
    _
  $region3: #{spearable_psn_forward.1} parent=0 // loop_header
    %s9 = sphi 0, %s13
    %p10 = scmp.ge.s32.totalorder %s9, 10
    %s17 = sphi 0, %s17
    %s19 = sphi 0, %s17
    %s20 = sphi 0, %s19
    %s34 = sphi 0, %s20
    %s38 = sphi 0, %s38
    %s40 = sphi 0, %s38
    %s41 = sphi 0, %s40
    %s55 = sphi 0, %s41
    %s61 = sphi 0, %s63
    %s64 = sphi 0, %s61
    %s65 = sphi 0, %s64
    %s81 = sphi 0, %s65
    %s87 = sphi 0, %s89
    %s90 = sphi 0, %s87
    %s91 = sphi 0, %s90
    %s107 = sphi 0, %s91
  $region4: #{spearable_psn_forward.1} parent=0 // loop_header_branch
    %12 = sbr.rel (%p10) target = $region8
  $region5: #{spearable_psn_forward.1} parent=0 // loop_body
    %s14 = ssub.s32 %s9, 1
    %s15 = ssub.s32 %s9, 2
    %s16 = sadd.s32 %s9, 1
    %s18 = sadd.s32 %s17, 1
    %p21 = scmp.eq.s32.totalorder %s9, 7
    %p22 = scmp.ne.s32.totalorder %s17, %s19
    %p23 = scmp.eq.s32.totalorder %s9, 0
    %p24 = por %p22, %p23
    %p25 = scmp.ne.s32.totalorder %s17, %s19
    %p26 = scmp.eq.s32.totalorder %s14, 7
    %p27 = por %p25, %p26
    %p28 = scmp.ne.s32.totalorder %s19, %s20
    %p29 = scmp.eq.s32.totalorder %s14, 0
    %p30 = por %p28, %p29
    %p31 = scmp.ne.s32.totalorder %s19, %s20
    %p32 = scmp.eq.s32.totalorder %s15, 7
    %p33 = por %p31, %p32
    %p35 = scmp.ne.s32.totalorder %s20, %s34
    %p36 = scmp.eq.s32.totalorder %s15, 0
    %p37 = por %p35, %p36
    %s39 = sadd.s32 %s38, 1
    %p42 = scmp.eq.s32.totalorder %s9, 7
    %p43 = scmp.ne.s32.totalorder %s38, %s40
    %p44 = scmp.eq.s32.totalorder %s9, 0
    %p45 = por %p43, %p44
    %p46 = scmp.ne.s32.totalorder %s38, %s40
    %p47 = scmp.eq.s32.totalorder %s14, 7
    %p48 = por %p46, %p47
    %p49 = scmp.ne.s32.totalorder %s40, %s41
    %p50 = scmp.eq.s32.totalorder %s14, 0
    %p51 = por %p49, %p50
    %p52 = scmp.ne.s32.totalorder %s40, %s41
    %p53 = scmp.eq.s32.totalorder %s15, 7
    %p54 = por %p52, %p53
    %p56 = scmp.ne.s32.totalorder %s41, %s55
    %p57 = scmp.eq.s32.totalorder %s15, 0
    %p58 = por %p56, %p57
    %s59 = ssub.s32 %s9, %s16
    %p60 = scmp.eq.s32.totalorder %s59, 0
    %s62 = sadd.s32 %s61, 1
    %s63 = scalar_select %p60, %s61, %s62
    %p66 = pneg %p60
    %p67 = scmp.eq.s32.totalorder %s9, 7
    %p68 = por %p66, %p67
    %p69 = scmp.ne.s32.totalorder %s61, %s64
    %p70 = scmp.eq.s32.totalorder %s9, 0
    %p71 = por %p69, %p70
    %p72 = scmp.ne.s32.totalorder %s61, %s64
    %p73 = scmp.eq.s32.totalorder %s14, 7
    %p74 = por %p72, %p73
    %p75 = scmp.ne.s32.totalorder %s64, %s65
    %p76 = scmp.eq.s32.totalorder %s14, 0
    %p77 = por %p75, %p76
    %p78 = scmp.ne.s32.totalorder %s64, %s65
    %p79 = scmp.eq.s32.totalorder %s15, 7
    %p80 = por %p78, %p79
    %p82 = scmp.ne.s32.totalorder %s65, %s81
    %p83 = scmp.eq.s32.totalorder %s15, 0
    %p84 = por %p82, %p83
    %s85 = ssub.s32 %s9, %s16
    %p86 = scmp.eq.s32.totalorder %s85, 0
    %s88 = sadd.s32 %s87, 1
    %s89 = scalar_select %p86, %s87, %s88
    %p92 = pneg %p86
    %p93 = scmp.eq.s32.totalorder %s9, 7
    %p94 = por %p92, %p93
    %p95 = scmp.ne.s32.totalorder %s87, %s90
    %p96 = scmp.eq.s32.totalorder %s9, 0
    %p97 = por %p95, %p96
    %p98 = scmp.ne.s32.totalorder %s87, %s90
    %p99 = scmp.eq.s32.totalorder %s14, 7
    %p100 = por %p98, %p99
    %p101 = scmp.ne.s32.totalorder %s90, %s91
    %p102 = scmp.eq.s32.totalorder %s14, 0
    %p103 = por %p101, %p102
    %p104 = scmp.ne.s32.totalorder %s90, %s91
    %p105 = scmp.eq.s32.totalorder %s15, 7
    %p106 = por %p104, %p105
    %p108 = scmp.ne.s32.totalorder %s91, %s107
    %p109 = scmp.eq.s32.totalorder %s15, 0
    %p110 = por %p108, %p109
    %p111 = scmp.le.s32.totalorder 1, %s9
    %p112 = scmp.lt.s32.totalorder %s9, 9
    %p113 = pnand %p111, %p112
    %p114 = pneg %p113
    // Predicated region
    $region9: #{spearable_psn_forward.1} parent=5 // pred_check
      _
    $region10: #{spearable_psn_forward.1} parent=5 // pred_check_branch
      %116 = sbr.rel (%p113) target = $region12
    $region11: #{spearable_psn_forward.1} parent=5 // pred_region
      %s117 = ssub.s32 %s9, 1
      // Predicated region
      $region13: #{spearable_psn_forward.1} parent=11 // pred_check
        %p118 = pneg %p30
      $region14: #{spearable_psn_forward.1} parent=11 // pred_check_branch
        %120 = sbr.rel (%p118) target = $region16
      $region15: #{spearable_psn_forward.1} parent=11 // pred_region
        _
      $region16: #{spearable_psn_forward.1} parent=11 // pred_fallthru
        _
      // Predicated region
      $region17: #{spearable_psn_forward.1} parent=11 // pred_check
        %p121 = pneg %p51
      $region18: #{spearable_psn_forward.1} parent=11 // pred_check_branch
        %123 = sbr.rel (%p121) target = $region20
      $region19: #{spearable_psn_forward.1} parent=11 // pred_region
        _
      $region20: #{spearable_psn_forward.1} parent=11 // pred_fallthru
        _
    $region12: #{spearable_psn_forward.1} parent=5 // pred_fallthru
      _
    %p124 = scmp.lt.s32.totalorder %s9, 8
    // Predicated region
    $region21: #{spearable_psn_forward.1} parent=5 // pred_check
      %p125 = pneg %p124
    $region22: #{spearable_psn_forward.1} parent=5 // pred_check_branch
      %127 = sbr.rel (%p125) target = $region24
    $region23: #{spearable_psn_forward.1} parent=5 // pred_region
      // Predicated region
      $region25: #{spearable_psn_forward.1} parent=23 // pred_check
        %p128 = pneg %p71
      $region26: #{spearable_psn_forward.1} parent=23 // pred_check_branch
        %130 = sbr.rel (%p128) target = $region28
      $region27: #{spearable_psn_forward.1} parent=23 // pred_region
        %s131 = smul.u32 2, %s9
        %p132 = scmp.lt.s32.totalorder %s131, 15
        %s133 = scalar_select %p132, %s131, 15
        %s134 = smul.addr %s133, 8
        %s135 = scalar_lea.vmem %s2, %s134
        %s136 = smul.u32 2, %s9
      $region28: #{spearable_psn_forward.1} parent=23 // pred_fallthru
        _
    $region24: #{spearable_psn_forward.1} parent=5 // pred_fallthru
      _
    %p137 = scmp.le.s32.totalorder 1, %s9
    %p138 = scmp.lt.s32.totalorder %s9, 9
    %p139 = pnand %p137, %p138
    %p140 = pneg %p139
    // Predicated region
    $region29: #{spearable_psn_forward.1} parent=5 // pred_check
      _
    $region30: #{spearable_psn_forward.1} parent=5 // pred_check_branch
      %142 = sbr.rel (%p139) target = $region32
    $region31: #{spearable_psn_forward.1} parent=5 // pred_region
      %s143 = ssub.s32 %s9, 1
      %p144 = pneg %p30
      %p145 = pneg %p27
      %p146 = pneg %p51
      %p147 = pneg %p48
      %s148 = smul.u32 2, %s14
      %p149 = scmp.lt.s32.totalorder %s148, 15
      %s150 = scalar_select %p149, %s148, 15
      %s151 = smul.addr %s150, 8
      %s152 = scalar_lea.vmem %s2, %s151
      %p153 = pneg %p77
      %p154 = pneg %p74
      %p155 = pneg %p103
      %p156 = pneg %p100
      %s157 = smul.u32 2, %s14
      %p158 = scmp.lt.s32.totalorder %s157, 15
      %s159 = scalar_select %p158, %s157, 15
      %s160 = smul.addr %s159, 8
      %s161 = scalar_lea.vmem %s3, %s160
      %s162 = smul.u32 2, %s14
      %p163 = scmp.lt.s32.totalorder %s162, 15
      %s164 = scalar_select %p163, %s162, 15
      %s165 = smul.addr %s164, 8
      %s166 = scalar_lea.vmem %s2, %s165
      %s167 = smul.u32 2, %s14
      %s168 = smul.u32 2, %s14
      %p169 = scmp.lt.s32.totalorder %s168, 15
      %s170 = scalar_select %p169, %s168, 15
      %s171 = smul.addr %s170, 8
      %s172 = scalar_lea.vmem %s3, %s171
      %s173 = smul.u32 2, %s14
      %v174 = vld [vmem:[%s166] sm:$0xff]
      %v175 = vld [vmem:[%s166 + $0x8] sm:$0xff]
      %v176 = vld [vmem:[%s0] sm:$0xff]
      %v177 = vld [vmem:[%s1] sm:$0xff]
      %179 = vset.pattern.permute.xlu0 0
      %180 = vperm.xlu0 %179, %v177
      %v181 = vpop.permute.xlu0 %180
      %vm183 = vcmask 64512
      %v185 = vsel %vm183, %v176, 0
      %187 = vmatprep.subr.mxu0 %v175
      %188 = vmatpush1.msra.mxu0 %v174
      %189 = vmatprep.subr.mxu0 0.0
      %190 = vmatpush1.msra.mxu0 0.0
      %191 = vmatprep.subr.mxu0 0.0
      %192 = vmatpush1.msra.mxu0 0.0
      %193 = vmatprep.subr.mxu0 0.0
      %194 = vmatpush1.msra.mxu0 0.0
      %195 = vmatprep.subr.mxu0 0.0
      %196 = vmatpush1.msra.mxu0 0.0
      %197 = vmatprep.subr.mxu0 0.0
      %198 = vmatpush1.msra.mxu0 0.0
      %199 = vmatprep.subr.mxu0 0.0
      %200 = vmatpush1.msra.mxu0 0.0
      %201 = vmatprep.subr.mxu0 0.0
      %202 = vmatpush1.msra.mxu0 0.0
      %203 = vmatprep.subr.mxu0 0.0
      %204 = vmatpush1.msra.mxu0 0.0
      %205 = vmatprep.subr.mxu0 0.0
      %206 = vmatpush1.msra.mxu0 0.0
      %207 = vmatprep.subr.mxu0 0.0
      %208 = vmatpush1.msra.mxu0 0.0
      %209 = vmatprep.subr.mxu0 0.0
      %210 = vmatpush1.msra.mxu0 0.0
      %211 = vmatprep.subr.mxu0 0.0
      %212 = vmatpush1.msra.mxu0 0.0
      %213 = vmatprep.subr.mxu0 0.0
      %214 = vmatpush1.msra.mxu0 0.0
      %215 = vmatprep.subr.mxu0 0.0
      %216 = vmatpush1.msra.mxu0 0.0
      %217 = vmatprep.subr.mxu0 0.0
      %218 = vmatpush1.msra.mxu0 0.0
      %219 = vmatprep.subr.mxu0 0.0
      %220 = vmatpush1.msra.mxu0 0.0
      %221 = vmatprep.subr.mxu0 0.0
      %222 = vmatpush1.msra.mxu0 0.0
      %223 = vmatprep.subr.mxu0 0.0
      %224 = vmatpush1.msra.mxu0 0.0
      %225 = vmatprep.subr.mxu0 0.0
      %226 = vmatpush1.msra.mxu0 0.0
      %227 = vmatprep.subr.mxu0 0.0
      %228 = vmatpush1.msra.mxu0 0.0
      %229 = vmatprep.subr.mxu0 0.0
      %230 = vmatpush1.msra.mxu0 0.0
      %231 = vmatprep.subr.mxu0 0.0
      %232 = vmatpush1.msra.mxu0 0.0
      %233 = vmatprep.subr.mxu0 0.0
      %234 = vmatpush1.msra.mxu0 0.0
      %235 = vmatprep.subr.mxu0 0.0
      %236 = vmatpush1.msra.mxu0 0.0
      %237 = vmatprep.subr.mxu0 0.0
      %238 = vmatpush1.msra.mxu0 0.0
      %239 = vmatprep.subr.mxu0 0.0
      %240 = vmatpush1.msra.mxu0 0.0
      %241 = vmatprep.subr.mxu0 0.0
      %242 = vmatpush1.msra.mxu0 0.0
      %243 = vmatprep.subr.mxu0 0.0
      %244 = vmatpush1.msra.mxu0 0.0
      %245 = vmatprep.subr.mxu0 0.0
      %246 = vmatpush1.msra.mxu0 0.0
      %247 = vmatprep.subr.mxu0 0.0
      %248 = vmatpush1.msra.mxu0 0.0
      %249 = vmatprep.subr.mxu0 0.0
      %250 = vmatpush1.msra.mxu0 0.0
      %251 = vmatprep.mubr.f32.mxu0 0.0
      %252 = vmatmul.mubr.f32.gmra.mrb[0].mxu0 %v185
      %v253 = vpop.f32.mrb[0].mxu0
      %v254 = vadd.f32 %v181, %v253
      %v255 = vpop.f32.mrb[0].mxu0
      %v256 = vadd.f32 %v181, %v255
      %257 = vdwg.mxu0
      %vm258 = vcmp.ge.f32.partialorder %v254, 0.0
      %vm259 = vcmp.ge.f32.partialorder %v256, 0.0
      %v260 = vsel %vm258, 1, 0
      %v261 = vsel %vm259, 1, 0
      %v262 = vcvt.s32.f32 %v260
      %v263 = vcvt.s32.f32 %v261
      %264 = vst [vmem:[%s172] sm:$0xff] %v262
      %265 = vst [vmem:[%s172 + $0x8] sm:$0xff] %v263
      %s266 = smul.u32 2, %s14
      %p267 = scmp.lt.s32.totalorder %s266, 15
      %s268 = scalar_select %p267, %s266, 15
      %s269 = smul.addr %s268, 8
      %s270 = scalar_lea.vmem %s3, %s269
      // Predicated region
      $region33: #{spearable_psn_forward.1} parent=31 // pred_check
        %p271 = pneg %p100
      $region34: #{spearable_psn_forward.1} parent=31 // pred_check_branch
        %273 = sbr.rel (%p271) target = $region36
      $region35: #{spearable_psn_forward.1} parent=31 // pred_region
        %s274 = smul.u32 2, %s14
      $region36: #{spearable_psn_forward.1} parent=31 // pred_fallthru
        _
    $region32: #{spearable_psn_forward.1} parent=5 // pred_fallthru
      _
    %p275 = scmp.le.s32.totalorder 2, %s9
    // Predicated region
    $region37: #{spearable_psn_forward.1} parent=5 // pred_check
      %p276 = pneg %p275
    $region38: #{spearable_psn_forward.1} parent=5 // pred_check_branch
      %278 = sbr.rel (%p276) target = $region40
    $region39: #{spearable_psn_forward.1} parent=5 // pred_region
      %s279 = ssub.s32 %s9, 2
      // Predicated region
      $region41: #{spearable_psn_forward.1} parent=39 // pred_check
        %p280 = pneg %p106
      $region42: #{spearable_psn_forward.1} parent=39 // pred_check_branch
        %282 = sbr.rel (%p280) target = $region44
      $region43: #{spearable_psn_forward.1} parent=39 // pred_region
        %s283 = smul.u32 2, %s15
        %p284 = scmp.lt.s32.totalorder %s283, 15
        %s285 = scalar_select %p284, %s283, 15
        %s286 = smul.addr %s285, 8
        %s287 = scalar_lea.vmem %s3, %s286
      $region44: #{spearable_psn_forward.1} parent=39 // pred_fallthru
        _
    $region40: #{spearable_psn_forward.1} parent=5 // pred_fallthru
      _
  $region6: #{spearable_psn_forward.1} parent=0 // loop_footer
    %s13 = sadd.s32 1, %s9
  $region7: #{spearable_psn_forward.1} parent=0 // loop_footer_branch
    %8 = sbr.rel target = $region3
  $region8: #{spearable_psn_forward.1} parent=0 // loop_exit
    _

</llo_original>
